<compile_context>
chip_gen: v5e
topology: v5e:2x2
jax: 0.10.0
libtpu: 0.0.40
codegen_flags: <defaults>
</compile_context>

<pallas_src>
import functools

import jax
import jax.numpy as jnp
from jax.experimental import pallas as pl
from jax.experimental.pallas import tpu as pltpu

F = 5                 # feature size fixed by the module (LayerNorm(5) / Linear(5, 5))
EPS = 1e-5            # torch.nn.LayerNorm default eps
MAX_TILE_N = 65536    # lanes per grid step (~8 MiB double-buffered f32 VMEM)
MIN_SPLIT_N = 8192    # only split into >=2 grid steps if each step gets >= this
SMALL_N_FALLBACK = 2048  # below this many tokens, plain fused XLA is faster


def _foo_kernel(x_ref, w_ref, b_ref, o_ref):
    # x_ref / o_ref: (F, TILE_N) VMEM tiles (rows = features, lanes = tokens).
    # w_ref: (F, F) VMEM, gamma-folded weight (out, in).  b_ref: (F, 1) VMEM,
    # beta-folded bias.
    x = x_ref[...].astype(jnp.float32)

    # LayerNorm statistics: sublane reduces over the 5 feature rows (XLU),
    # broadcast back over sublanes — all at full lane density.
    mean = jnp.mean(x, axis=0, keepdims=True)              # (1, TILE_N)
    centered = x - mean
    var = jnp.mean(centered * centered, axis=0, keepdims=True)
    xhat = centered * jax.lax.rsqrt(var + EPS)             # EUP rsqrt

    # gamma/beta were folded into w/b wrapper-side, so the rest is a single
    # (5,5) @ (5, TILE_N) MXU matmul + bias + ReLU.
    y = jnp.dot(w_ref[...].astype(jnp.float32), xhat,
                preferred_element_type=jnp.float32)        # (F, TILE_N)
    y = jnp.maximum(y + b_ref[...].astype(jnp.float32), 0.0)

    # Single lane-dense full-tile store (unmasked vst path).
    o_ref[...] = y.astype(o_ref.dtype)


def _reference_forward(x, gamma, beta, weight, bias):
    """Pure-JAX forward with the module's exact semantics (also the small-N path)."""
    mean = jnp.mean(x, axis=-1, keepdims=True)
    var = jnp.mean((x - mean) ** 2, axis=-1, keepdims=True)
    h = (x - mean) * jax.lax.rsqrt(var + EPS) * gamma + beta
    return jnp.maximum(h @ weight.T + bias, 0.0)


@functools.partial(jax.jit, static_argnames=("min_tokens_for_pallas",))
def foo_forward(x, gamma, beta, weight, bias, *,
                min_tokens_for_pallas=SMALL_N_FALLBACK):
    """x: (..., 5); gamma/beta/bias: (5,); weight: (5, 5) as (out, in)."""
    orig_shape = x.shape
    f = orig_shape[-1]
    n = 1
    for d in orig_shape[:-1]:
        n *= d

    # Small-N fallback: the fused XLA expression beats kernel launch + layout
    # plumbing for a few thousand tokens or fewer.
    if n < min_tokens_for_pallas:
        return _reference_forward(x, gamma, beta, weight, bias)

    # Fold the LayerNorm affine into the linear:
    #   Linear(LN(x)) = (W * gamma) @ xhat + (W @ beta + b)
    w_fold = weight * gamma[None, :]                       # (out, in)
    b_fold = (weight @ beta + bias).reshape(f, 1)          # (out, 1)

    # Lane-dense layout: tokens on the lane (last) axis.  The pad/transpose
    # here and the un-transpose below are inside this jit so XLA fuses them
    # with neighbouring copies.
    x2 = x.reshape(n, f).T                                 # (f, n)

    # Tile selection: big tiles first, >=2 steps when there's enough work
    # (v7x megacore), tail padding bounded to <128 lanes per step.
    n_lane = max(128, pl.cdiv(n, 128) * 128)
    num_steps = pl.cdiv(n_lane, MAX_TILE_N)
    if num_steps < 2 and n_lane >= 2 * MIN_SPLIT_N:
        num_steps = 2
    tile_n = pl.cdiv(pl.cdiv(n_lane, num_steps), 128) * 128
    n_pad = num_steps * tile_n
    if n_pad != n:
        x2 = jnp.pad(x2, ((0, 0), (0, n_pad - n)))

    out = pl.pallas_call(
        _foo_kernel,
        out_shape=jax.ShapeDtypeStruct((f, n_pad), x.dtype),
        grid=(num_steps,),
        in_specs=[
            pl.BlockSpec((f, tile_n), lambda i: (0, i)),   # activations
            pl.BlockSpec((f, f), lambda i: (0, 0)),        # folded weight (resident)
            pl.BlockSpec((f, 1), lambda i: (0, 0)),        # folded bias   (resident)
        ],
        out_specs=pl.BlockSpec((f, tile_n), lambda i: (0, i)),
        compiler_params=pltpu.CompilerParams(
            dimension_semantics=("parallel",)),
    )(x2, w_fold, b_fold)

    return out[:, :n].T.reshape(orig_shape)


if __name__ == "__main__":
    key = jax.random.PRNGKey(0)
    k_x, k_g, k_be, k_w, k_b, k_x2 = jax.random.split(key, 6)

    # Deterministic parameters.  Non-trivial gamma/beta exercise the affine
    # folding (the module's forward semantics are identical for any values).
    bound = 1.0 / (F ** 0.5)
    gamma = 1.0 + 0.1 * jax.random.normal(k_g, (F,), dtype=jnp.float32)
    beta = 0.1 * jax.random.normal(k_be, (F,), dtype=jnp.float32)
    weight = jax.random.uniform(k_w, (F, F), minval=-bound, maxval=bound,
                                dtype=jnp.float32)          # (out, in)
    bias = jax.random.uniform(k_b, (F,), minval=-bound, maxval=bound,
                              dtype=jnp.float32)

    # 1) Small module-sized input (batch=2, seq=8, features=5), forced through
    #    the Pallas kernel to exercise it at the demo shape.
    x_small = jax.random.normal(k_x, (2, 8, F), dtype=jnp.float32)
    out_small = foo_forward(x_small, gamma, beta, weight, bias,
                            min_tokens_for_pallas=0)
    jax.block_until_ready(out_small)
    ref_small = _reference_forward(x_small, gamma, beta, weight, bias)
    assert out_small.shape == x_small.shape
    assert jnp.allclose(out_small, ref_small, atol=3e-5, rtol=3e-5)

    # 2) Larger input exercising a multi-step grid (2 steps of 8192 lanes).
    x_big = jax.random.normal(k_x2, (4, 4096, F), dtype=jnp.float32)
    out_big = foo_forward(x_big, gamma, beta, weight, bias)
    jax.block_until_ready(out_big)
    ref_big = _reference_forward(x_big, gamma, beta, weight, bias)
    assert jnp.allclose(out_big, ref_big, atol=3e-5, rtol=3e-5)

    print("KERNEL_OK")
</pallas_src>

<mosaic_0001>
module attributes {stable_mosaic.version = 11 : i64} {
  func.func @_foo_kernel(%arg0: i32, %arg1: memref<5x128xf32, #tpu.memory_space<vmem>>, %arg2: memref<5x5xf32, #tpu.memory_space<vmem>>, %arg3: memref<5x1xf32, #tpu.memory_space<vmem>>, %arg4: memref<5x128xf32, #tpu.memory_space<vmem>>) attributes {dimension_semantics = [#tpu.dimension_semantics<parallel>], iteration_bounds = array<i64: 1>, scalar_prefetch = 0 : i64, scratch_operands = 0 : i64, tpu.core_type = #tpu.core_type<tc>, window_params = [{transform_indices = @transform_0, window_bounds = array<i64: 5, 128>}, {pipeline_mode = #tpu.pipeline_mode<synchronous>, transform_indices = @transform_1, window_bounds = array<i64: 5, 5>}, {pipeline_mode = #tpu.pipeline_mode<synchronous>, transform_indices = @transform_2, window_bounds = array<i64: 5, 1>}, {transform_indices = @transform_3, window_bounds = array<i64: 5, 128>}]} {
    %c0 = arith.constant 0 : index
    %c0_0 = arith.constant 0 : index
    %0 = vector.load %arg1[%c0, %c0_0] : memref<5x128xf32, #tpu.memory_space<vmem>>, vector<5x128xf32>
    %cst = arith.constant dense<0.000000e+00> : vector<128xf32>
    %1 = vector.multi_reduction <add>, %0, %cst [0] : vector<5x128xf32> to vector<128xf32>
    %2 = vector.shape_cast %1 : vector<128xf32> to vector<1x128xf32>
    %cst_1 = arith.constant 5.000000e+00 : f32
    %3 = vector.broadcast %cst_1 : f32 to vector<1x128xf32>
    %4 = arith.divf %2, %3 : vector<1x128xf32>
    %5 = vector.broadcast %4 : vector<1x128xf32> to vector<5x128xf32>
    %6 = arith.subf %0, %5 : vector<5x128xf32>
    %7 = arith.mulf %6, %6 : vector<5x128xf32>
    %cst_2 = arith.constant dense<0.000000e+00> : vector<128xf32>
    %8 = vector.multi_reduction <add>, %7, %cst_2 [0] : vector<5x128xf32> to vector<128xf32>
    %9 = vector.shape_cast %8 : vector<128xf32> to vector<1x128xf32>
    %cst_3 = arith.constant 5.000000e+00 : f32
    %10 = vector.broadcast %cst_3 : f32 to vector<1x128xf32>
    %11 = arith.divf %9, %10 : vector<1x128xf32>
    %cst_4 = arith.constant 9.99999974E-6 : f32
    %12 = vector.broadcast %cst_4 : f32 to vector<1x128xf32>
    %13 = arith.addf %11, %12 : vector<1x128xf32>
    %14 = math.rsqrt %13 : vector<1x128xf32>
    %15 = vector.broadcast %14 : vector<1x128xf32> to vector<5x128xf32>
    %16 = arith.mulf %6, %15 : vector<5x128xf32>
    %c0_5 = arith.constant 0 : index
    %c0_6 = arith.constant 0 : index
    %17 = vector.load %arg2[%c0_5, %c0_6] : memref<5x5xf32, #tpu.memory_space<vmem>>, vector<5x5xf32>
    %cst_7 = arith.constant dense<0.000000e+00> : vector<5x128xf32>
    %18 = tpu.matmul %17, %16, %cst_7 {dimension_numbers = #tpu.dot_dimension_numbers<[1], [0], [0], [1], [0, 0, 1, 1], [], []>} : vector<5x5xf32>, vector<5x128xf32>, vector<5x128xf32> -> vector<5x128xf32>
    %c0_8 = arith.constant 0 : index
    %c0_9 = arith.constant 0 : index
    %19 = vector.load %arg3[%c0_8, %c0_9] : memref<5x1xf32, #tpu.memory_space<vmem>>, vector<5x1xf32>
    %20 = vector.broadcast %19 : vector<5x1xf32> to vector<5x128xf32>
    %21 = arith.addf %18, %20 : vector<5x128xf32>
    %cst_10 = arith.constant 0.000000e+00 : f32
    %22 = vector.broadcast %cst_10 : f32 to vector<5x128xf32>
    %23 = arith.maximumf %21, %22 : vector<5x128xf32>
    %c0_11 = arith.constant 0 : index
    %c0_12 = arith.constant 0 : index
    %24 = vector.load %arg4[%c0_11, %c0_12] : memref<5x128xf32, #tpu.memory_space<vmem>>, vector<5x128xf32>
    tpu.vector_store %arg4[%c0_11, %c0_12], %23 {strides = array<i32>} : memref<5x128xf32, #tpu.memory_space<vmem>>, vector<5x128xf32>,
    return
  }
  func.func @transform_0(%arg0: i32) -> (i32, i32) {
    %c0_i32 = arith.constant 0 : i32
    %c0_i32_0 = arith.constant 0 : i32
    return %c0_i32, %arg0 : i32, i32
  }
  func.func @transform_1(%arg0: i32) -> (i32, i32) {
    %c0_i32 = arith.constant 0 : i32
    %c0_i32_0 = arith.constant 0 : i32
    %c0_i32_1 = arith.constant 0 : i32
    return %c0_i32, %c0_i32_0 : i32, i32
  }
  func.func @transform_2(%arg0: i32) -> (i32, i32) {
    %c0_i32 = arith.constant 0 : i32
    %c0_i32_0 = arith.constant 0 : i32
    %c0_i32_1 = arith.constant 0 : i32
    return %c0_i32, %c0_i32_0 : i32, i32
  }
  func.func @transform_3(%arg0: i32) -> (i32, i32) {
    %c0_i32 = arith.constant 0 : i32
    %c0_i32_0 = arith.constant 0 : i32
    return %c0_i32, %arg0 : i32, i32
  }
}

</mosaic_0001>

<llo_original>
// kernel: foo_forward.1
$region0: #{foo_forward.1}
  #allocation0 [shape = 'u32[]', space=smem, size = 0x4, offset = 0x4, fixed_abs, tag = 'smem constant byte address 0x4 - core index']
  #allocation1 [shape = 'u32[72,128]{1,0:T(1,128)}', space=vmem, size = 0x9000, scoped, tag = 'internal scratch']
  %s0 = inlined_call_operand.vmem [shape: f32[5,128], index: 0, kind: input, shape index: {}]
  %s1 = inlined_call_operand.vmem [shape: f32[5,5], index: 1, kind: input, shape index: {}]
  %s2 = inlined_call_operand.vmem [shape: f32[5,1], index: 2, kind: input, shape index: {}]
  %s3 = inlined_call_operand.vmem [shape: f32[5,128], index: 3, kind: output, shape index: {}]
  %s4 = sld [smem:[#allocation0]]
  $region22: #{foo_forward.1} parent=0
    _
  %s6 = ssub.s32 1, %s4
  %s7 = scalar_select 0, %s6, %s4
  // Predicated region
  $region2: #{foo_forward.1} parent=0 // pred_check
    _
  $region3: #{foo_forward.1} parent=0 // pred_check_branch
    %9 = sbr.rel (0) target = $region5
  $region4: #{foo_forward.1} parent=0 // pred_region
    _
  $region5: #{foo_forward.1} parent=0 // pred_fallthru
    _
  // Predicated region
  $region6: #{foo_forward.1} parent=0 // pred_check
    _
  $region7: #{foo_forward.1} parent=0 // pred_check_branch
    %11 = sbr.rel (0) target = $region9
  $region8: #{foo_forward.1} parent=0 // pred_region
    _
  $region9: #{foo_forward.1} parent=0 // pred_fallthru
    _
  // Predicated region
  $region10: #{foo_forward.1} parent=0 // pred_check
    _
  $region11: #{foo_forward.1} parent=0 // pred_check_branch
    %13 = sbr.rel (0) target = $region13
  $region12: #{foo_forward.1} parent=0 // pred_region
    _
  $region13: #{foo_forward.1} parent=0 // pred_fallthru
    _
  %v14 = vld [vmem:[%s0] sm:$0x1f]
  %vm15 = vcmask 1044480
  %v16 = vsel %vm15, %v14, 0.0
  %v17 = vrot.slane %v16, 4
  %v18 = vadd.f32 %v16, %v17
  %v19 = vrot.slane %v18, 2
  %v20 = vadd.f32 %v18, %v19
  %v21 = vrot.slane %v20, 1
  %v22 = vadd.f32 %v20, %v21
  %v23 = vrcp.pop 5.0
  %v24 = vmul.f32 5.0, %v23
  %v25 = vsub.f32 1.0, %v24
  %v26 = vmul.f32 %v23, %v25
  %v27 = vadd.f32 %v23, %v26
  %vm28 = vweird.f32 %v23
  %v29 = vsel %vm28, %v23, %v27
  %v30 = vmul.f32 %v22, %v29
  %v31 = vsub.f32 %v14, %v30
  %v32 = vmul.f32 %v31, %v31
  %v33 = vsel %vm15, %v32, 0.0
  %v34 = vrot.slane %v33, 4
  %v35 = vadd.f32 %v33, %v34
  %v36 = vrot.slane %v35, 2
  %v37 = vadd.f32 %v35, %v36
  %v38 = vrot.slane %v37, 1
  %v39 = vadd.f32 %v37, %v38
  %v40 = vmul.f32 %v39, %v29
  %v41 = vadd.f32 %v40, 1e-05
  %v42 = vrsqrt.pop %v41
  %v43 = vmul.f32 %v42, %v41
  %v44 = vmul.f32 %v43, %v42
  %v45 = vmul.f32 0.5, %v44
  %v46 = vsub.f32 1.5, %v45
  %v47 = vmul.f32 %v42, %v46
  %vm48 = vweird.f32 %v41
  %vm49 = vweird.f32 %v42
  %vm50 = vmor %vm48, %vm49
  %v51 = vsel %vm50, %v42, %v47
  %v52 = vmul.f32 %v31, %v51
  %v53 = vld [vmem:[%s1] sm:$0x1f]
  %v54 = vld [vmem:[%s2] sm:$0x1f]
  %56 = vset.pattern.permute.xlu0 0
  %57 = vperm.xlu0 %56, %v54
  %v58 = vpop.permute.xlu0 %57
  %vm60 = vcmask 39936
  %v62 = vsel %vm60, %v53, 0
  %v65 = vsel %vm15, %v52, 0
  %67 = vmatpush.msra.mxu0 0.0
  %68 = vmatpush.msra.mxu0 0.0
  %69 = vmatpush.msra.mxu0 0.0
  %70 = vmatpush.msra.mxu0 0.0
  %71 = vmatpush.msra.mxu0 0.0
  %72 = vmatpush.msra.mxu0 0.0
  %73 = vmatpush.msra.mxu0 0.0
  %74 = vmatpush.msra.mxu0 0.0
  %75 = vmatpush.msra.mxu0 0.0
  %76 = vmatpush.msra.mxu0 0.0
  %77 = vmatpush.msra.mxu0 0.0
  %78 = vmatpush.msra.mxu0 0.0
  %79 = vmatpush.msra.mxu0 0.0
  %80 = vmatpush.msra.mxu0 0.0
  %81 = vmatpush.msra.mxu0 0.0
  %82 = vmatpush.msra.mxu0 %v65
  %83 = vmatmul.f32.gmra.mxu0 %v62
  %v84 = vpop.f32.mrf.mxu0
  %v85 = vadd.f32 %v58, %v84
  %86 = vdwg.mxu0
  %v87 = vmax.f32 %v85, 0.0
  %88 = vst [vmem:[%s3] sm:$0x1f] %v87
  // Predicated region
  $region14: #{foo_forward.1} parent=0 // pred_check
    _
  $region15: #{foo_forward.1} parent=0 // pred_check_branch
    %90 = sbr.rel (0) target = $region17
  $region16: #{foo_forward.1} parent=0 // pred_region
    _
  $region17: #{foo_forward.1} parent=0 // pred_fallthru
    _
  // Predicated region
  $region18: #{foo_forward.1} parent=0 // pred_check
    _
  $region19: #{foo_forward.1} parent=0 // pred_check_branch
    %92 = sbr.rel (0) target = $region21
  $region20: #{foo_forward.1} parent=0 // pred_region
    _
  $region21: #{foo_forward.1} parent=0 // pred_fallthru
    _

</llo_original>
